<compile_context>
chip_gen: v6e
topology: v6e:2x2x1
jax: 0.10.0
libtpu: 0.0.40
codegen_flags: <defaults>
</compile_context>

<pallas_src>
import jax
import jax.numpy as jnp
from jax.experimental import pallas as pl
from jax.experimental.pallas import tpu as pltpu

BN_EPS = 1e-5
W3_ROWS = 8  # fc3 weight padded to 8 sublanes; only row 0 is real


# ----------------------------------------------------------------------------
# Kernel
# ----------------------------------------------------------------------------
def _mlp_kernel(x_ref, w1_ref, b1_ref, w2_ref, b2_ref, w3_ref, b3_ref, o_ref):
    # x tile: (tile_b, in_dim) f32 -> bf16 in-kernel (cast hidden under MXU).
    xb = x_ref[...].astype(jnp.bfloat16)

    # fc1 + ReLU (transposed): (h1, in_dim) . (tile_b, in_dim)^T -> (h1, tile_b)
    h = jax.lax.dot_general(
        w1_ref[...], xb,
        dimension_numbers=(((1,), (1,)), ((), ())),
        preferred_element_type=jnp.float32)
    h = jnp.maximum(h + b1_ref[...], 0.0)

    # fc2 + ReLU (bn1 already folded into w2/b2): (h2, h1) @ (h1, tile_b)
    h = jnp.dot(w2_ref[...], h.astype(jnp.bfloat16),
                preferred_element_type=jnp.float32)
    h = jnp.maximum(h + b2_ref[...], 0.0)

    # fc3 (bn2 folded; 8-row padded weight, only row 0 real): (8, h2) @ (h2, tile_b)
    out = jnp.dot(w3_ref[...], h.astype(jnp.bfloat16),
                  preferred_element_type=jnp.float32) + b3_ref[...]

    # Lane-dense scalar output row: 4 bytes of HBM writeback per batch row.
    o_ref[...] = out[0:1, :].astype(o_ref.dtype)


# ----------------------------------------------------------------------------
# Wrapper
# ----------------------------------------------------------------------------
def fold_params(p):
    """Fold eval-mode BatchNorm into the following Linear; transpose + bf16-cast."""
    s1 = p["gamma1"] * jax.lax.rsqrt(p["rv1"] + BN_EPS)
    t1 = p["beta1"] - p["rm1"] * s1
    s2 = p["gamma2"] * jax.lax.rsqrt(p["rv2"] + BN_EPS)
    t2 = p["beta2"] - p["rm2"] * s2

    w2f = p["w2"] * s1[:, None]
    b2f = p["b2"] + t1 @ p["w2"]
    w3f = p["w3"] * s2[:, None]          # (h2, 1)
    b3f = p["b3"] + t2 @ p["w3"]         # (1,)

    h2 = p["w3"].shape[0]
    w3t = jnp.zeros((W3_ROWS, h2), jnp.float32).at[0, :].set(w3f[:, 0])
    b3t = jnp.zeros((W3_ROWS, 1), jnp.float32).at[0, 0].set(b3f[0])

    return dict(
        w1t=p["w1"].T.astype(jnp.bfloat16),            # (h1, in_dim)
        b1=p["b1"].reshape(-1, 1).astype(jnp.float32),  # (h1, 1)
        w2t=w2f.T.astype(jnp.bfloat16),                # (h2, h1)  (bn1 folded)
        b2=b2f.reshape(-1, 1).astype(jnp.float32),      # (h2, 1)  (bn1 folded)
        w3t=w3t.astype(jnp.bfloat16),                  # (8, h2)  (bn2 folded, padded)
        b3=b3t,                                         # (8, 1)   (bn2 folded, padded)
    )


def mlp_forward(x, fp, tile_b=512):
    """Fused MLP forward. x: (B, input_dim) f32, fp: folded params. Returns (B,) f32."""
    B, in_dim = x.shape
    x = x.astype(jnp.float32)   # kernel casts to bf16 internally

    # Batch tile: multiple of 256 (fills v6e/v7x 256-wide MXU, amortizes the
    # ~0.35 us per-grid-step overhead); shrink for small batches.
    if B <= tile_b:
        tile_b = max(256, ((B + 255) // 256) * 256)
    padded_b = ((B + tile_b - 1) // tile_b) * tile_b
    if padded_b != B:
        x = jnp.pad(x, ((0, padded_b - B), (0, 0)))

    h1 = fp["w1t"].shape[0]
    h2 = fp["w2t"].shape[0]

    const = lambda i: (0, 0)  # weights / biases: VMEM-resident across grid steps

    out = pl.pallas_call(
        _mlp_kernel,
        out_shape=jax.ShapeDtypeStruct((1, padded_b), jnp.float32),
        grid=(padded_b // tile_b,),
        in_specs=[
            pl.BlockSpec((tile_b, in_dim), lambda i: (i, 0)),   # x tile (f32)
            pl.BlockSpec((h1, in_dim), const),                  # w1^T
            pl.BlockSpec((h1, 1), const),                       # b1 (column)
            pl.BlockSpec((h2, h1), const),                      # w2^T (bn1 folded)
            pl.BlockSpec((h2, 1), const),                       # b2 (bn1 folded)
            pl.BlockSpec((W3_ROWS, h2), const),                 # w3^T (bn2 folded, padded)
            pl.BlockSpec((W3_ROWS, 1), const),                  # b3 (bn2 folded, padded)
        ],
        out_specs=pl.BlockSpec((1, tile_b), lambda i: (0, i)),  # lane-dense row
        compiler_params=pltpu.CompilerParams(
            dimension_semantics=("parallel",)),
    )(x, fp["w1t"], fp["b1"], fp["w2t"], fp["b2"], fp["w3t"], fp["b3"])

    # squeeze(-1) + drop batch padding (glue, outside kernel)
    return out[0, :B]


# ----------------------------------------------------------------------------
# Params + references
# ----------------------------------------------------------------------------
def init_params(key, input_dim, hidden_dim1=256, hidden_dim2=256):
    ks = jax.random.split(key, 14)
    f32 = jnp.float32

    def lin(kw, kb, fan_in, fan_out):
        w = jax.random.normal(kw, (fan_in, fan_out), f32) * 0.05
        b = jax.random.normal(kb, (fan_out,), f32) * 0.01
        return w, b

    w1, b1 = lin(ks[0], ks[1], input_dim, hidden_dim1)
    w2, b2 = lin(ks[2], ks[3], hidden_dim1, hidden_dim2)
    w3, b3 = lin(ks[4], ks[5], hidden_dim2, 1)

    # Non-trivial BN running stats so the folding math is actually exercised.
    def bn(kg, kb_, km, kv, h):
        gamma = 1.0 + 0.1 * jax.random.normal(kg, (h,), f32)
        beta = 0.1 * jax.random.normal(kb_, (h,), f32)
        rm = 0.1 * jax.random.normal(km, (h,), f32)
        rv = 1.0 + 0.1 * jax.random.uniform(kv, (h,), f32)
        return gamma, beta, rm, rv

    g1, be1, rm1, rv1 = bn(ks[6], ks[7], ks[8], ks[9], hidden_dim1)
    g2, be2, rm2, rv2 = bn(ks[10], ks[11], ks[12], ks[13], hidden_dim2)

    return dict(w1=w1, b1=b1, gamma1=g1, beta1=be1, rm1=rm1, rv1=rv1,
                w2=w2, b2=b2, gamma2=g2, beta2=be2, rm2=rm2, rv2=rv2,
                w3=w3, b3=b3)


def reference_forward_f32(x, p):
    """Pure-f32 JAX reference of the eval-mode PyTorch forward."""
    h = jnp.maximum(x @ p["w1"] + p["b1"], 0.0)
    h = (h - p["rm1"]) / jnp.sqrt(p["rv1"] + BN_EPS) * p["gamma1"] + p["beta1"]
    h = jnp.maximum(h @ p["w2"] + p["b2"], 0.0)
    h = (h - p["rm2"]) / jnp.sqrt(p["rv2"] + BN_EPS) * p["gamma2"] + p["beta2"]
    out = h @ p["w3"] + p["b3"]
    return out[:, 0]


def reference_forward_matched(x, fp):
    """Same-precision (bf16 weights/inputs, f32 accumulate) folded, transposed reference."""
    xb = x.astype(jnp.bfloat16)
    h = jax.lax.dot_general(fp["w1t"], xb, (((1,), (1,)), ((), ())),
                            preferred_element_type=jnp.float32) + fp["b1"]
    h = jnp.maximum(h, 0.0)
    h = jnp.dot(fp["w2t"], h.astype(jnp.bfloat16),
                preferred_element_type=jnp.float32) + fp["b2"]
    h = jnp.maximum(h, 0.0)
    out = jnp.dot(fp["w3t"], h.astype(jnp.bfloat16),
                  preferred_element_type=jnp.float32) + fp["b3"]
    return out[0, :]


# ----------------------------------------------------------------------------
# Demo / self-check
# ----------------------------------------------------------------------------
if __name__ == "__main__":
    key = jax.random.PRNGKey(0)
    k_x, k_p = jax.random.split(key)

    B, INPUT_DIM = 8, 32
    HIDDEN1, HIDDEN2 = 256, 256

    x = jax.random.normal(k_x, (B, INPUT_DIM), jnp.float32)
    params = init_params(k_p, INPUT_DIM, HIDDEN1, HIDDEN2)
    fparams = fold_params(params)

    y = mlp_forward(x, fparams)
    jax.block_until_ready(y)
    assert y.shape == (B,), y.shape

    # Bit-for-bit-ish check against the same-precision folded math.
    y_matched = reference_forward_matched(x, fparams)
    err_m = float(jnp.max(jnp.abs(y - y_matched)))
    assert jnp.allclose(y, y_matched, atol=2e-3, rtol=2e-3), err_m

    # Semantic check against the full-f32 eval-mode PyTorch forward
    # (looser tolerance: bf16 weights + BN folding reassociation).
    y_f32 = reference_forward_f32(x, params)
    err_f = float(jnp.max(jnp.abs(y - y_f32)))
    assert jnp.allclose(y, y_f32, atol=5e-2, rtol=5e-2), err_f

    print("KERNEL_OK")
</pallas_src>

<mosaic_0001>
module attributes {stable_mosaic.version = 11 : i64} {
  func.func @_mlp_kernel(%arg0: i32, %arg1: memref<256x32xf32, #tpu.memory_space<vmem>>, %arg2: memref<256x32xbf16, #tpu.memory_space<vmem>>, %arg3: memref<256x1xf32, #tpu.memory_space<vmem>>, %arg4: memref<256x256xbf16, #tpu.memory_space<vmem>>, %arg5: memref<256x1xf32, #tpu.memory_space<vmem>>, %arg6: memref<8x256xbf16, #tpu.memory_space<vmem>>, %arg7: memref<8x1xf32, #tpu.memory_space<vmem>>, %arg8: memref<1x256xf32, #tpu.memory_space<vmem>>) attributes {dimension_semantics = [#tpu.dimension_semantics<parallel>], iteration_bounds = array<i64: 1>, scalar_prefetch = 0 : i64, scratch_operands = 0 : i64, tpu.core_type = #tpu.core_type<tc>, window_params = [{transform_indices = @transform_0, window_bounds = array<i64: 256, 32>}, {pipeline_mode = #tpu.pipeline_mode<synchronous>, transform_indices = @transform_1, window_bounds = array<i64: 256, 32>}, {pipeline_mode = #tpu.pipeline_mode<synchronous>, transform_indices = @transform_2, window_bounds = array<i64: 256, 1>}, {pipeline_mode = #tpu.pipeline_mode<synchronous>, transform_indices = @transform_3, window_bounds = array<i64: 256, 256>}, {pipeline_mode = #tpu.pipeline_mode<synchronous>, transform_indices = @transform_4, window_bounds = array<i64: 256, 1>}, {pipeline_mode = #tpu.pipeline_mode<synchronous>, transform_indices = @transform_5, window_bounds = array<i64: 8, 256>}, {pipeline_mode = #tpu.pipeline_mode<synchronous>, transform_indices = @transform_6, window_bounds = array<i64: 8, 1>}, {transform_indices = @transform_7, window_bounds = array<i64: 1, 256>}]} {
    %c0 = arith.constant 0 : index
    %c0_0 = arith.constant 0 : index
    %0 = vector.load %arg1[%c0, %c0_0] : memref<256x32xf32, #tpu.memory_space<vmem>>, vector<256x32xf32>
    %1 = arith.truncf %0 : vector<256x32xf32> to vector<256x32xbf16>
    %c0_1 = arith.constant 0 : index
    %c0_2 = arith.constant 0 : index
    %2 = vector.load %arg2[%c0_1, %c0_2] : memref<256x32xbf16, #tpu.memory_space<vmem>>, vector<256x32xbf16>
    %cst = arith.constant dense<0.000000e+00> : vector<256x256xf32>
    %3 = tpu.matmul %2, %1, %cst {dimension_numbers = #tpu.dot_dimension_numbers<[1], [1], [0], [0], [0, 0, 1, 0], [], []>} : vector<256x32xbf16>, vector<256x32xbf16>, vector<256x256xf32> -> vector<256x256xf32>
    %c0_3 = arith.constant 0 : index
    %c0_4 = arith.constant 0 : index
    %4 = vector.load %arg3[%c0_3, %c0_4] : memref<256x1xf32, #tpu.memory_space<vmem>>, vector<256x1xf32>
    %5 = vector.broadcast %4 : vector<256x1xf32> to vector<256x256xf32>
    %6 = arith.addf %3, %5 : vector<256x256xf32>
    %cst_5 = arith.constant 0.000000e+00 : f32
    %7 = vector.broadcast %cst_5 : f32 to vector<256x256xf32>
    %8 = arith.maximumf %6, %7 : vector<256x256xf32>
    %c0_6 = arith.constant 0 : index
    %c0_7 = arith.constant 0 : index
    %9 = vector.load %arg4[%c0_6, %c0_7] : memref<256x256xbf16, #tpu.memory_space<vmem>>, vector<256x256xbf16>
    %10 = arith.truncf %8 : vector<256x256xf32> to vector<256x256xbf16>
    %cst_8 = arith.constant dense<0.000000e+00> : vector<256x256xf32>
    %11 = tpu.matmul %9, %10, %cst_8 {dimension_numbers = #tpu.dot_dimension_numbers<[1], [0], [0], [1], [0, 0, 1, 1], [], []>} : vector<256x256xbf16>, vector<256x256xbf16>, vector<256x256xf32> -> vector<256x256xf32>
    %c0_9 = arith.constant 0 : index
    %c0_10 = arith.constant 0 : index
    %12 = vector.load %arg5[%c0_9, %c0_10] : memref<256x1xf32, #tpu.memory_space<vmem>>, vector<256x1xf32>
    %13 = vector.broadcast %12 : vector<256x1xf32> to vector<256x256xf32>
    %14 = arith.addf %11, %13 : vector<256x256xf32>
    %cst_11 = arith.constant 0.000000e+00 : f32
    %15 = vector.broadcast %cst_11 : f32 to vector<256x256xf32>
    %16 = arith.maximumf %14, %15 : vector<256x256xf32>
    %c0_12 = arith.constant 0 : index
    %c0_13 = arith.constant 0 : index
    %17 = vector.load %arg6[%c0_12, %c0_13] : memref<8x256xbf16, #tpu.memory_space<vmem>>, vector<8x256xbf16>
    %18 = arith.truncf %16 : vector<256x256xf32> to vector<256x256xbf16>
    %cst_14 = arith.constant dense<0.000000e+00> : vector<8x256xf32>
    %19 = tpu.matmul %17, %18, %cst_14 {dimension_numbers = #tpu.dot_dimension_numbers<[1], [0], [0], [1], [0, 0, 1, 1], [], []>} : vector<8x256xbf16>, vector<256x256xbf16>, vector<8x256xf32> -> vector<8x256xf32>
    %c0_15 = arith.constant 0 : index
    %c0_16 = arith.constant 0 : index
    %20 = vector.load %arg7[%c0_15, %c0_16] : memref<8x1xf32, #tpu.memory_space<vmem>>, vector<8x1xf32>
    %21 = vector.broadcast %20 : vector<8x1xf32> to vector<8x256xf32>
    %22 = arith.addf %19, %21 : vector<8x256xf32>
    %23 = vector.extract_strided_slice %22 {offsets = [0, 0], sizes = [1, 256], strides = [1, 1]} : vector<8x256xf32> to vector<1x256xf32>
    %c0_17 = arith.constant 0 : index
    %c0_18 = arith.constant 0 : index
    %24 = vector.load %arg8[%c0_17, %c0_18] : memref<1x256xf32, #tpu.memory_space<vmem>>, vector<1x256xf32>
    tpu.vector_store %arg8[%c0_17, %c0_18], %23 {strides = array<i32>} : memref<1x256xf32, #tpu.memory_space<vmem>>, vector<1x256xf32>,
    return
  }
  func.func @transform_0(%arg0: i32) -> (i32, i32) {
    %c0_i32 = arith.constant 0 : i32
    %c0_i32_0 = arith.constant 0 : i32
    return %arg0, %c0_i32 : i32, i32
  }
  func.func @transform_1(%arg0: i32) -> (i32, i32) {
    %c0_i32 = arith.constant 0 : i32
    %c0_i32_0 = arith.constant 0 : i32
    %c0_i32_1 = arith.constant 0 : i32
    return %c0_i32, %c0_i32_0 : i32, i32
  }
  func.func @transform_2(%arg0: i32) -> (i32, i32) {
    %c0_i32 = arith.constant 0 : i32
    %c0_i32_0 = arith.constant 0 : i32
    %c0_i32_1 = arith.constant 0 : i32
    return %c0_i32, %c0_i32_0 : i32, i32
  }
  func.func @transform_3(%arg0: i32) -> (i32, i32) {
    %c0_i32 = arith.constant 0 : i32
    %c0_i32_0 = arith.constant 0 : i32
    %c0_i32_1 = arith.constant 0 : i32
    return %c0_i32, %c0_i32_0 : i32, i32
  }
  func.func @transform_4(%arg0: i32) -> (i32, i32) {
    %c0_i32 = arith.constant 0 : i32
    %c0_i32_0 = arith.constant 0 : i32
    %c0_i32_1 = arith.constant 0 : i32
    return %c0_i32, %c0_i32_0 : i32, i32
  }
  func.func @transform_5(%arg0: i32) -> (i32, i32) {
    %c0_i32 = arith.constant 0 : i32
    %c0_i32_0 = arith.constant 0 : i32
    %c0_i32_1 = arith.constant 0 : i32
    return %c0_i32, %c0_i32_0 : i32, i32
  }
  func.func @transform_6(%arg0: i32) -> (i32, i32) {
    %c0_i32 = arith.constant 0 : i32
    %c0_i32_0 = arith.constant 0 : i32
    %c0_i32_1 = arith.constant 0 : i32
    return %c0_i32, %c0_i32_0 : i32, i32
  }
  func.func @transform_7(%arg0: i32) -> (i32, i32) {
    %c0_i32 = arith.constant 0 : i32
    %c0_i32_0 = arith.constant 0 : i32
    return %c0_i32, %arg0 : i32, i32
  }
}

</mosaic_0001>

<llo_original>
// kernel: tpu_custom_call.1
$region0: #{tpu_custom_call.1}
  #allocation0 [shape = 'u32[]', space=smem, size = 0x4, offset = 0x4, fixed_abs, tag = 'smem constant byte address 0x4 - core index']
  #allocation1 [shape = 'u32[144,128]{1,0:T(1,128)}', space=vmem, size = 0x12000, scoped, tag = 'internal scratch']
  %s0 = inlined_call_operand.vmem [shape: f32[256,32], index: 0, kind: input, shape index: {}]
  %s1 = inlined_call_operand.vmem [shape: bf16[256,32], index: 1, kind: input, shape index: {}]
  %s2 = inlined_call_operand.vmem [shape: f32[256,1], index: 2, kind: input, shape index: {}]
  %s3 = inlined_call_operand.vmem [shape: bf16[256,256], index: 3, kind: input, shape index: {}]
  %s4 = inlined_call_operand.vmem [shape: f32[256,1], index: 4, kind: input, shape index: {}]
  %s5 = inlined_call_operand.vmem [shape: bf16[8,256], index: 5, kind: input, shape index: {}]
  %s6 = inlined_call_operand.vmem [shape: f32[8,1], index: 6, kind: input, shape index: {}]
  %s7 = inlined_call_operand.hbm [shape: f32[1,256], index: 7, kind: output, shape index: {}]
  %s8 = sld [smem:[#allocation0]]
  $region38: #{tpu_custom_call.1} parent=0
    _
  %s10 = ssub.s32 1, %s8
  %s11 = scalar_select 0, %s10, %s8
  $region1: #{tpu_custom_call.1} parent=0
    #allocation2 [shape = 'u8[1024]{0}', space=vmem, size = 0x400, scoped, tag = 'output window, operand 0, single buffered']
    #allocation3 [shape = 's32[1]{0}', space=sflag, size = 0x4, scoped, tag = 'scoped memory for tpu_custom_call.1']
    %12 = vsyncpa [#allocation3], 0
    // Predicated region
    $region2: #{tpu_custom_call.1} parent=1 // pred_check
      _
    $region3: #{tpu_custom_call.1} parent=1 // pred_check_branch
      %14 = sbr.rel (0) target = $region5
    $region4: #{tpu_custom_call.1} parent=1 // pred_region
      _
    $region5: #{tpu_custom_call.1} parent=1 // pred_fallthru
      _
    // Predicated region
    $region6: #{tpu_custom_call.1} parent=1 // pred_check
      _
    $region7: #{tpu_custom_call.1} parent=1 // pred_check_branch
      %16 = sbr.rel (0) target = $region9
    $region8: #{tpu_custom_call.1} parent=1 // pred_region
      _
    $region9: #{tpu_custom_call.1} parent=1 // pred_fallthru
      _
    // Predicated region
    $region10: #{tpu_custom_call.1} parent=1 // pred_check
      _
    $region11: #{tpu_custom_call.1} parent=1 // pred_check_branch
      %18 = sbr.rel (0) target = $region13
    $region12: #{tpu_custom_call.1} parent=1 // pred_region
      _
    $region13: #{tpu_custom_call.1} parent=1 // pred_fallthru
      _
    // Predicated region
    $region14: #{tpu_custom_call.1} parent=1 // pred_check
      _
    $region15: #{tpu_custom_call.1} parent=1 // pred_check_branch
      %20 = sbr.rel (0) target = $region17
    $region16: #{tpu_custom_call.1} parent=1 // pred_region
      _
    $region17: #{tpu_custom_call.1} parent=1 // pred_fallthru
      _
    // Predicated region
    $region18: #{tpu_custom_call.1} parent=1 // pred_check
      _
    $region19: #{tpu_custom_call.1} parent=1 // pred_check_branch
      %22 = sbr.rel (0) target = $region21
    $region20: #{tpu_custom_call.1} parent=1 // pred_region
      _
    $region21: #{tpu_custom_call.1} parent=1 // pred_fallthru
      _
    // Predicated region
    $region22: #{tpu_custom_call.1} parent=1 // pred_check
      _
    $region23: #{tpu_custom_call.1} parent=1 // pred_check_branch
      %24 = sbr.rel (0) target = $region25
    $region24: #{tpu_custom_call.1} parent=1 // pred_region
      _
    $region25: #{tpu_custom_call.1} parent=1 // pred_fallthru
      _
    // Predicated region
    $region26: #{tpu_custom_call.1} parent=1 // pred_check
      _
    $region27: #{tpu_custom_call.1} parent=1 // pred_check_branch
      %26 = sbr.rel (0) target = $region29
    $region28: #{tpu_custom_call.1} parent=1 // pred_region
      _
    $region29: #{tpu_custom_call.1} parent=1 // pred_fallthru
      _
    %v28 = vld [vmem:[%s0] sm:$0xff]
    %v29 = vld [vmem:[%s0 + $0x8] sm:$0xff]
    %v30 = vld [vmem:[%s0 + $0x10] sm:$0xff]
    %v31 = vld [vmem:[%s0 + $0x18] sm:$0xff]
    %v32 = vld [vmem:[%s0 + $0x20] sm:$0xff]
    %v33 = vld [vmem:[%s0 + $0x28] sm:$0xff]
    %v34 = vld [vmem:[%s0 + $0x30] sm:$0xff]
    %v35 = vld [vmem:[%s0 + $0x38] sm:$0xff]
    %v36 = vld [vmem:[%s0 + $0x40] sm:$0xff]
    %v37 = vld [vmem:[%s0 + $0x48] sm:$0xff]
    %v38 = vld [vmem:[%s0 + $0x50] sm:$0xff]
    %v39 = vld [vmem:[%s0 + $0x58] sm:$0xff]
    %v40 = vld [vmem:[%s0 + $0x60] sm:$0xff]
    %v41 = vld [vmem:[%s0 + $0x68] sm:$0xff]
    %v42 = vld [vmem:[%s0 + $0x70] sm:$0xff]
    %v43 = vld [vmem:[%s0 + $0x78] sm:$0xff]
    %v44 = vld [vmem:[%s0 + $0x80] sm:$0xff]
    %v45 = vld [vmem:[%s0 + $0x88] sm:$0xff]
    %v46 = vld [vmem:[%s0 + $0x90] sm:$0xff]
    %v47 = vld [vmem:[%s0 + $0x98] sm:$0xff]
    %v48 = vld [vmem:[%s0 + $0xa0] sm:$0xff]
    %v49 = vld [vmem:[%s0 + $0xa8] sm:$0xff]
    %v50 = vld [vmem:[%s0 + $0xb0] sm:$0xff]
    %v51 = vld [vmem:[%s0 + $0xb8] sm:$0xff]
    %v52 = vld [vmem:[%s0 + $0xc0] sm:$0xff]
    %v53 = vld [vmem:[%s0 + $0xc8] sm:$0xff]
    %v54 = vld [vmem:[%s0 + $0xd0] sm:$0xff]
    %v55 = vld [vmem:[%s0 + $0xd8] sm:$0xff]
    %v56 = vld [vmem:[%s0 + $0xe0] sm:$0xff]
    %v57 = vld [vmem:[%s0 + $0xe8] sm:$0xff]
    %v58 = vld [vmem:[%s0 + $0xf0] sm:$0xff]
    %v59 = vld [vmem:[%s0 + $0xf8] sm:$0xff]
    %v60 = vpack.c.bf16 %v29, %v28
    %v61 = vpack.c.bf16 %v31, %v30
    %v62 = vpack.c.bf16 %v33, %v32
    %v63 = vpack.c.bf16 %v35, %v34
    %v64 = vpack.c.bf16 %v37, %v36
    %v65 = vpack.c.bf16 %v39, %v38
    %v66 = vpack.c.bf16 %v41, %v40
    %v67 = vpack.c.bf16 %v43, %v42
    %v68 = vpack.c.bf16 %v45, %v44
    %v69 = vpack.c.bf16 %v47, %v46
    %v70 = vpack.c.bf16 %v49, %v48
    %v71 = vpack.c.bf16 %v51, %v50
    %v72 = vpack.c.bf16 %v53, %v52
    %v73 = vpack.c.bf16 %v55, %v54
    %v74 = vpack.c.bf16 %v57, %v56
    %v75 = vpack.c.bf16 %v59, %v58
    %v76 = vld [vmem:[%s1] sm:$0xf]
    %v77 = vld [vmem:[%s1 + $0x4] sm:$0xf]
    %v78 = vld [vmem:[%s1 + $0x8] sm:$0xf]
    %v79 = vld [vmem:[%s1 + $0xc] sm:$0xf]
    %v80 = vld [vmem:[%s1 + $0x10] sm:$0xf]
    %v81 = vld [vmem:[%s1 + $0x14] sm:$0xf]
    %v82 = vld [vmem:[%s1 + $0x18] sm:$0xf]
    %v83 = vld [vmem:[%s1 + $0x1c] sm:$0xf]
    %v84 = vld [vmem:[%s1 + $0x20] sm:$0xf]
    %v85 = vld [vmem:[%s1 + $0x24] sm:$0xf]
    %v86 = vld [vmem:[%s1 + $0x28] sm:$0xf]
    %v87 = vld [vmem:[%s1 + $0x2c] sm:$0xf]
    %v88 = vld [vmem:[%s1 + $0x30] sm:$0xf]
    %v89 = vld [vmem:[%s1 + $0x34] sm:$0xf]
    %v90 = vld [vmem:[%s1 + $0x38] sm:$0xf]
    %v91 = vld [vmem:[%s1 + $0x3c] sm:$0xf]
    %v92 = vld [vmem:[%s1 + $0x40] sm:$0xf]
    %v93 = vld [vmem:[%s1 + $0x44] sm:$0xf]
    %v94 = vld [vmem:[%s1 + $0x48] sm:$0xf]
    %v95 = vld [vmem:[%s1 + $0x4c] sm:$0xf]
    %v96 = vld [vmem:[%s1 + $0x50] sm:$0xf]
    %v97 = vld [vmem:[%s1 + $0x54] sm:$0xf]
    %v98 = vld [vmem:[%s1 + $0x58] sm:$0xf]
    %v99 = vld [vmem:[%s1 + $0x5c] sm:$0xf]
    %v100 = vld [vmem:[%s1 + $0x60] sm:$0xf]
    %v101 = vld [vmem:[%s1 + $0x64] sm:$0xf]
    %v102 = vld [vmem:[%s1 + $0x68] sm:$0xf]
    %v103 = vld [vmem:[%s1 + $0x6c] sm:$0xf]
    %v104 = vld [vmem:[%s1 + $0x70] sm:$0xf]
    %v105 = vld [vmem:[%s1 + $0x74] sm:$0xf]
    %v106 = vld [vmem:[%s1 + $0x78] sm:$0xf]
    %v107 = vld [vmem:[%s1 + $0x7c] sm:$0xf]
    %v108 = vld [vmem:[%s2] sm:$0xff]
    %v109 = vld [vmem:[%s2 + $0x8] sm:$0xff]
    %v110 = vld [vmem:[%s2 + $0x10] sm:$0xff]
    %v111 = vld [vmem:[%s2 + $0x18] sm:$0xff]
    %v112 = vld [vmem:[%s2 + $0x20] sm:$0xff]
    %v113 = vld [vmem:[%s2 + $0x28] sm:$0xff]
    %v114 = vld [vmem:[%s2 + $0x30] sm:$0xff]
    %v115 = vld [vmem:[%s2 + $0x38] sm:$0xff]
    %v116 = vld [vmem:[%s2 + $0x40] sm:$0xff]
    %v117 = vld [vmem:[%s2 + $0x48] sm:$0xff]
    %v118 = vld [vmem:[%s2 + $0x50] sm:$0xff]
    %v119 = vld [vmem:[%s2 + $0x58] sm:$0xff]
    %v120 = vld [vmem:[%s2 + $0x60] sm:$0xff]
    %v121 = vld [vmem:[%s2 + $0x68] sm:$0xff]
    %v122 = vld [vmem:[%s2 + $0x70] sm:$0xff]
    %v123 = vld [vmem:[%s2 + $0x78] sm:$0xff]
    %v124 = vld [vmem:[%s2 + $0x80] sm:$0xff]
    %v125 = vld [vmem:[%s2 + $0x88] sm:$0xff]
    %v126 = vld [vmem:[%s2 + $0x90] sm:$0xff]
    %v127 = vld [vmem:[%s2 + $0x98] sm:$0xff]
    %v128 = vld [vmem:[%s2 + $0xa0] sm:$0xff]
    %v129 = vld [vmem:[%s2 + $0xa8] sm:$0xff]
    %v130 = vld [vmem:[%s2 + $0xb0] sm:$0xff]
    %v131 = vld [vmem:[%s2 + $0xb8] sm:$0xff]
    %v132 = vld [vmem:[%s2 + $0xc0] sm:$0xff]
    %v133 = vld [vmem:[%s2 + $0xc8] sm:$0xff]
    %v134 = vld [vmem:[%s2 + $0xd0] sm:$0xff]
    %v135 = vld [vmem:[%s2 + $0xd8] sm:$0xff]
    %v136 = vld [vmem:[%s2 + $0xe0] sm:$0xff]
    %v137 = vld [vmem:[%s2 + $0xe8] sm:$0xff]
    %v138 = vld [vmem:[%s2 + $0xf0] sm:$0xff]
    %v139 = vld [vmem:[%s2 + $0xf8] sm:$0xff]
    %141 = vset.pattern.permute.xlu0 0
    %142 = vperm.xlu0 %141, %v108
    %v143 = vpop.permute.xlu0 %142
    %146 = vset.pattern.permute.xlu0 0
    %147 = vperm.xlu0 %146, %v109
    %v148 = vpop.permute.xlu0 %147
    %151 = vset.pattern.permute.xlu0 0
    %152 = vperm.xlu0 %151, %v110
    %v153 = vpop.permute.xlu0 %152
    %156 = vset.pattern.permute.xlu0 0
    %157 = vperm.xlu0 %156, %v111
    %v158 = vpop.permute.xlu0 %157
    %161 = vset.pattern.permute.xlu0 0
    %162 = vperm.xlu0 %161, %v112
    %v163 = vpop.permute.xlu0 %162
    %166 = vset.pattern.permute.xlu0 0
    %167 = vperm.xlu0 %166, %v113
    %v168 = vpop.permute.xlu0 %167
    %171 = vset.pattern.permute.xlu0 0
    %172 = vperm.xlu0 %171, %v114
    %v173 = vpop.permute.xlu0 %172
    %176 = vset.pattern.permute.xlu0 0
    %177 = vperm.xlu0 %176, %v115
    %v178 = vpop.permute.xlu0 %177
    %181 = vset.pattern.permute.xlu0 0
    %182 = vperm.xlu0 %181, %v116
    %v183 = vpop.permute.xlu0 %182
    %186 = vset.pattern.permute.xlu0 0
    %187 = vperm.xlu0 %186, %v117
    %v188 = vpop.permute.xlu0 %187
    %191 = vset.pattern.permute.xlu0 0
    %192 = vperm.xlu0 %191, %v118
    %v193 = vpop.permute.xlu0 %192
    %196 = vset.pattern.permute.xlu0 0
    %197 = vperm.xlu0 %196, %v119
    %v198 = vpop.permute.xlu0 %197
    %201 = vset.pattern.permute.xlu0 0
    %202 = vperm.xlu0 %201, %v120
    %v203 = vpop.permute.xlu0 %202
    %206 = vset.pattern.permute.xlu0 0
    %207 = vperm.xlu0 %206, %v121
    %v208 = vpop.permute.xlu0 %207
    %211 = vset.pattern.permute.xlu0 0
    %212 = vperm.xlu0 %211, %v122
    %v213 = vpop.permute.xlu0 %212
    %216 = vset.pattern.permute.xlu0 0
    %217 = vperm.xlu0 %216, %v123
    %v218 = vpop.permute.xlu0 %217
    %221 = vset.pattern.permute.xlu0 0
    %222 = vperm.xlu0 %221, %v124
    %v223 = vpop.permute.xlu0 %222
    %226 = vset.pattern.permute.xlu0 0
    %227 = vperm.xlu0 %226, %v125
    %v228 = vpop.permute.xlu0 %227
    %231 = vset.pattern.permute.xlu0 0
    %232 = vperm.xlu0 %231, %v126
    %v233 = vpop.permute.xlu0 %232
    %236 = vset.pattern.permute.xlu0 0
    %237 = vperm.xlu0 %236, %v127
    %v238 = vpop.permute.xlu0 %237
    %241 = vset.pattern.permute.xlu0 0
    %242 = vperm.xlu0 %241, %v128
    %v243 = vpop.permute.xlu0 %242
    %246 = vset.pattern.permute.xlu0 0
    %247 = vperm.xlu0 %246, %v129
    %v248 = vpop.permute.xlu0 %247
    %251 = vset.pattern.permute.xlu0 0
    %252 = vperm.xlu0 %251, %v130
    %v253 = vpop.permute.xlu0 %252
    %256 = vset.pattern.permute.xlu0 0
    %257 = vperm.xlu0 %256, %v131
    %v258 = vpop.permute.xlu0 %257
    %261 = vset.pattern.permute.xlu0 0
    %262 = vperm.xlu0 %261, %v132
    %v263 = vpop.permute.xlu0 %262
    %266 = vset.pattern.permute.xlu0 0
    %267 = vperm.xlu0 %266, %v133
    %v268 = vpop.permute.xlu0 %267
    %271 = vset.pattern.permute.xlu0 0
    %272 = vperm.xlu0 %271, %v134
    %v273 = vpop.permute.xlu0 %272
    %276 = vset.pattern.permute.xlu0 0
    %277 = vperm.xlu0 %276, %v135
    %v278 = vpop.permute.xlu0 %277
    %281 = vset.pattern.permute.xlu0 0
    %282 = vperm.xlu0 %281, %v136
    %v283 = vpop.permute.xlu0 %282
    %286 = vset.pattern.permute.xlu0 0
    %287 = vperm.xlu0 %286, %v137
    %v288 = vpop.permute.xlu0 %287
    %291 = vset.pattern.permute.xlu0 0
    %292 = vperm.xlu0 %291, %v138
    %v293 = vpop.permute.xlu0 %292
    %296 = vset.pattern.permute.xlu0 0
    %297 = vperm.xlu0 %296, %v139
    %v298 = vpop.permute.xlu0 %297
    %v332 = vunpack.c.l.b16 %v76
    %v333 = vunpack.c.l.b16 %v77
    %v334 = vunpack.c.l.b16 %v78
    %v335 = vunpack.c.l.b16 %v79
    %v336 = vunpack.c.l.b16 %v80
    %v337 = vunpack.c.l.b16 %v81
    %v338 = vunpack.c.l.b16 %v82
    %v339 = vunpack.c.l.b16 %v83
    %v340 = vunpack.c.l.b16 %v84
    %v341 = vunpack.c.l.b16 %v85
    %v342 = vunpack.c.l.b16 %v86
    %v343 = vunpack.c.l.b16 %v87
    %v344 = vunpack.c.l.b16 %v88
    %v345 = vunpack.c.l.b16 %v89
    %v346 = vunpack.c.l.b16 %v90
    %v347 = vunpack.c.l.b16 %v91
    %v348 = vunpack.c.l.b16 %v92
    %v349 = vunpack.c.l.b16 %v93
    %v350 = vunpack.c.l.b16 %v94
    %v351 = vunpack.c.l.b16 %v95
    %v352 = vunpack.c.l.b16 %v96
    %v353 = vunpack.c.l.b16 %v97
    %v354 = vunpack.c.l.b16 %v98
    %v355 = vunpack.c.l.b16 %v99
    %v356 = vunpack.c.l.b16 %v100
    %v357 = vunpack.c.l.b16 %v101
    %v358 = vunpack.c.l.b16 %v102
    %v359 = vunpack.c.l.b16 %v103
    %v360 = vunpack.c.l.b16 %v104
    %v361 = vunpack.c.l.b16 %v105
    %v362 = vunpack.c.l.b16 %v106
    %v363 = vunpack.c.l.b16 %v107
    %v364 = vpack.c.b16 %v333, %v332
    %v365 = vpack.c.b16 %v335, %v334
    %v366 = vpack.c.b16 %v337, %v336
    %v367 = vpack.c.b16 %v339, %v338
    %v368 = vpack.c.b16 %v341, %v340
    %v369 = vpack.c.b16 %v343, %v342
    %v370 = vpack.c.b16 %v345, %v344
    %v371 = vpack.c.b16 %v347, %v346
    %v372 = vpack.c.b16 %v349, %v348
    %v373 = vpack.c.b16 %v351, %v350
    %v374 = vpack.c.b16 %v353, %v352
    %v375 = vpack.c.b16 %v355, %v354
    %v376 = vpack.c.b16 %v357, %v356
    %v377 = vpack.c.b16 %v359, %v358
    %v378 = vpack.c.b16 %v361, %v360
    %v379 = vpack.c.b16 %v363, %v362
    %vm380 = vcmask 261120
    %v382 = vsel %vm380, %v364, 0
    %v385 = vsel %vm380, %v365, 0
    %v388 = vsel %vm380, %v366, 0
    %v391 = vsel %vm380, %v367, 0
    %v394 = vsel %vm380, %v368, 0
    %v397 = vsel %vm380, %v369, 0
    %v400 = vsel %vm380, %v370, 0
    %v403 = vsel %vm380, %v371, 0
    %v406 = vsel %vm380, %v372, 0
    %v409 = vsel %vm380, %v373, 0
    %v412 = vsel %vm380, %v374, 0
    %v415 = vsel %vm380, %v375, 0
    %v418 = vsel %vm380, %v376, 0
    %v421 = vsel %vm380, %v377, 0
    %v424 = vsel %vm380, %v378, 0
    %v427 = vsel %vm380, %v379, 0
    %v430 = vsel %vm380, %v60, 0
    %v433 = vsel %vm380, %v61, 0
    %v436 = vsel %vm380, %v62, 0
    %v439 = vsel %vm380, %v63, 0
    %v442 = vsel %vm380, %v64, 0
    %v445 = vsel %vm380, %v65, 0
    %v448 = vsel %vm380, %v66, 0
    %v451 = vsel %vm380, %v67, 0
    %v454 = vsel %vm380, %v68, 0
    %v457 = vsel %vm380, %v69, 0
    %v460 = vsel %vm380, %v70, 0
    %v463 = vsel %vm380, %v71, 0
    %v466 = vsel %vm380, %v72, 0
    %v469 = vsel %vm380, %v73, 0
    %v472 = vsel %vm380, %v74, 0
    %v475 = vsel %vm380, %v75, 0
    %477 = vmatprep.subr.bf16.mxu0 0
    %478 = vmatpush1.bf16.xpose.msra.mxu0 %v451
    %479 = vmatprep.subr.bf16.mxu0 0
    %480 = vmatpush1.bf16.xpose.msra.mxu0 %v448
    %481 = vmatprep.subr.bf16.mxu0 0
    %482 = vmatpush1.bf16.xpose.msra.mxu0 %v445
    %483 = vmatprep.subr.bf16.mxu0 0
    %484 = vmatpush1.bf16.xpose.msra.mxu0 %v442
    %485 = vmatprep.subr.bf16.mxu0 0
    %486 = vmatpush1.bf16.xpose.msra.mxu0 %v439
    %487 = vmatprep.subr.bf16.mxu0 0
    %488 = vmatpush1.bf16.xpose.msra.mxu0 %v436
    %489 = vmatprep.subr.bf16.mxu0 0
    %490 = vmatpush1.bf16.xpose.msra.mxu0 %v433
    %491 = vmatprep.subr.bf16.mxu0 0
    %492 = vmatpush1.bf16.xpose.msra.mxu0 %v430
    %493 = vmatprep.subr.bf16.mxu0 0
    %494 = vmatpush2.bf16.xpose.msra.mxu0 %v475
    %495 = vmatprep.subr.bf16.mxu0 0
    %496 = vmatpush2.bf16.xpose.msra.mxu0 %v472
    %497 = vmatprep.subr.bf16.mxu0 0
    %498 = vmatpush2.bf16.xpose.msra.mxu0 %v469
    %499 = vmatprep.subr.bf16.mxu0 0
    %500 = vmatpush2.bf16.xpose.msra.mxu0 %v466
    %501 = vmatprep.subr.bf16.mxu0 0
    %502 = vmatpush2.bf16.xpose.msra.mxu0 %v463
    %503 = vmatprep.subr.bf16.mxu0 0
    %504 = vmatpush2.bf16.xpose.msra.mxu0 %v460
    %505 = vmatprep.subr.bf16.mxu0 0
    %506 = vmatpush2.bf16.xpose.msra.mxu0 %v457
    %507 = vmatprep.subr.bf16.mxu0 0
    %508 = vmatpush2.bf16.xpose.msra.mxu0 %v454
    %509 = vmatprep.mubr.bf16.mxu0 0
    %510 = vmatmul.mubr.bf16.gmra.mxu0 %v382
    %v511 = vpop.f32.mrf.mxu0
    %v512 = vadd.f32 %v143, %v511
    %v513 = vpop.f32.mrf.mxu0
    %v514 = vadd.f32 %v143, %v513
    %v515 = vpop.f32.mrf.mxu0
    %v516 = vadd.f32 %v148, %v515
    %v517 = vpop.f32.mrf.mxu0
    %v518 = vadd.f32 %v148, %v517
    %519 = vmatprep.mubr.bf16.mxu0 0
    %520 = vmatmul.mubr.bf16.gmra.mxu0 %v385
    %v521 = vpop.f32.mrf.mxu0
    %v522 = vadd.f32 %v153, %v521
    %v523 = vpop.f32.mrf.mxu0
    %v524 = vadd.f32 %v153, %v523
    %v525 = vpop.f32.mrf.mxu0
    %v526 = vadd.f32 %v158, %v525
    %v527 = vpop.f32.mrf.mxu0
    %v528 = vadd.f32 %v158, %v527
    %529 = vmatprep.mubr.bf16.mxu0 0
    %530 = vmatmul.mubr.bf16.gmra.mxu0 %v388
    %v531 = vpop.f32.mrf.mxu0
    %v532 = vadd.f32 %v163, %v531
    %v533 = vpop.f32.mrf.mxu0
    %v534 = vadd.f32 %v163, %v533
    %v535 = vpop.f32.mrf.mxu0
    %v536 = vadd.f32 %v168, %v535
    %v537 = vpop.f32.mrf.mxu0
    %v538 = vadd.f32 %v168, %v537
    %539 = vmatprep.mubr.bf16.mxu0 0
    %540 = vmatmul.mubr.bf16.gmra.mxu0 %v391
    %v541 = vpop.f32.mrf.mxu0
    %v542 = vadd.f32 %v173, %v541
    %v543 = vpop.f32.mrf.mxu0
    %v544 = vadd.f32 %v173, %v543
    %v545 = vpop.f32.mrf.mxu0
    %v546 = vadd.f32 %v178, %v545
    %v547 = vpop.f32.mrf.mxu0
    %v548 = vadd.f32 %v178, %v547
    %549 = vmatprep.mubr.bf16.mxu0 0
    %550 = vmatmul.mubr.bf16.gmra.mxu0 %v394
    %v551 = vpop.f32.mrf.mxu0
    %v552 = vadd.f32 %v183, %v551
    %v553 = vpop.f32.mrf.mxu0
    %v554 = vadd.f32 %v183, %v553
    %v555 = vpop.f32.mrf.mxu0
    %v556 = vadd.f32 %v188, %v555
    %v557 = vpop.f32.mrf.mxu0
    %v558 = vadd.f32 %v188, %v557
    %559 = vmatprep.mubr.bf16.mxu0 0
    %560 = vmatmul.mubr.bf16.gmra.mxu0 %v397
    %v561 = vpop.f32.mrf.mxu0
    %v562 = vadd.f32 %v193, %v561
    %v563 = vpop.f32.mrf.mxu0
    %v564 = vadd.f32 %v193, %v563
    %v565 = vpop.f32.mrf.mxu0
    %v566 = vadd.f32 %v198, %v565
    %v567 = vpop.f32.mrf.mxu0
    %v568 = vadd.f32 %v198, %v567
    %569 = vmatprep.mubr.bf16.mxu0 0
    %570 = vmatmul.mubr.bf16.gmra.mxu0 %v400
    %v571 = vpop.f32.mrf.mxu0
    %v572 = vadd.f32 %v203, %v571
    %v573 = vpop.f32.mrf.mxu0
    %v574 = vadd.f32 %v203, %v573
    %v575 = vpop.f32.mrf.mxu0
    %v576 = vadd.f32 %v208, %v575
    %v577 = vpop.f32.mrf.mxu0
    %v578 = vadd.f32 %v208, %v577
    %579 = vmatprep.mubr.bf16.mxu0 0
    %580 = vmatmul.mubr.bf16.gmra.mxu0 %v403
    %v581 = vpop.f32.mrf.mxu0
    %v582 = vadd.f32 %v213, %v581
    %v583 = vpop.f32.mrf.mxu0
    %v584 = vadd.f32 %v213, %v583
    %v585 = vpop.f32.mrf.mxu0
    %v586 = vadd.f32 %v218, %v585
    %v587 = vpop.f32.mrf.mxu0
    %v588 = vadd.f32 %v218, %v587
    %589 = vmatprep.mubr.bf16.mxu0 0
    %590 = vmatmul.mubr.bf16.gmra.mxu0 %v406
    %v591 = vpop.f32.mrf.mxu0
    %v592 = vadd.f32 %v223, %v591
    %v593 = vpop.f32.mrf.mxu0
    %v594 = vadd.f32 %v223, %v593
    %v595 = vpop.f32.mrf.mxu0
    %v596 = vadd.f32 %v228, %v595
    %v597 = vpop.f32.mrf.mxu0
    %v598 = vadd.f32 %v228, %v597
    %599 = vmatprep.mubr.bf16.mxu0 0
    %600 = vmatmul.mubr.bf16.gmra.mxu0 %v409
    %v601 = vpop.f32.mrf.mxu0
    %v602 = vadd.f32 %v233, %v601
    %v603 = vpop.f32.mrf.mxu0
    %v604 = vadd.f32 %v233, %v603
    %v605 = vpop.f32.mrf.mxu0
    %v606 = vadd.f32 %v238, %v605
    %v607 = vpop.f32.mrf.mxu0
    %v608 = vadd.f32 %v238, %v607
    %609 = vmatprep.mubr.bf16.mxu0 0
    %610 = vmatmul.mubr.bf16.gmra.mxu0 %v412
    %v611 = vpop.f32.mrf.mxu0
    %v612 = vadd.f32 %v243, %v611
    %v613 = vpop.f32.mrf.mxu0
    %v614 = vadd.f32 %v243, %v613
    %v615 = vpop.f32.mrf.mxu0
    %v616 = vadd.f32 %v248, %v615
    %v617 = vpop.f32.mrf.mxu0
    %v618 = vadd.f32 %v248, %v617
    %619 = vmatprep.mubr.bf16.mxu0 0
    %620 = vmatmul.mubr.bf16.gmra.mxu0 %v415
    %v621 = vpop.f32.mrf.mxu0
    %v622 = vadd.f32 %v253, %v621
    %v623 = vpop.f32.mrf.mxu0
    %v624 = vadd.f32 %v253, %v623
    %v625 = vpop.f32.mrf.mxu0
    %v626 = vadd.f32 %v258, %v625
    %v627 = vpop.f32.mrf.mxu0
    %v628 = vadd.f32 %v258, %v627
    %629 = vmatprep.mubr.bf16.mxu0 0
    %630 = vmatmul.mubr.bf16.gmra.mxu0 %v418
    %v631 = vpop.f32.mrf.mxu0
    %v632 = vadd.f32 %v263, %v631
    %v633 = vpop.f32.mrf.mxu0
    %v634 = vadd.f32 %v263, %v633
    %v635 = vpop.f32.mrf.mxu0
    %v636 = vadd.f32 %v268, %v635
    %v637 = vpop.f32.mrf.mxu0
    %v638 = vadd.f32 %v268, %v637
    %639 = vmatprep.mubr.bf16.mxu0 0
    %640 = vmatmul.mubr.bf16.gmra.mxu0 %v421
    %v641 = vpop.f32.mrf.mxu0
    %v642 = vadd.f32 %v273, %v641
    %v643 = vpop.f32.mrf.mxu0
    %v644 = vadd.f32 %v273, %v643
    %v645 = vpop.f32.mrf.mxu0
    %v646 = vadd.f32 %v278, %v645
    %v647 = vpop.f32.mrf.mxu0
    %v648 = vadd.f32 %v278, %v647
    %649 = vmatprep.mubr.bf16.mxu0 0
    %650 = vmatmul.mubr.bf16.gmra.mxu0 %v424
    %v651 = vpop.f32.mrf.mxu0
    %v652 = vadd.f32 %v283, %v651
    %v653 = vpop.f32.mrf.mxu0
    %v654 = vadd.f32 %v283, %v653
    %v655 = vpop.f32.mrf.mxu0
    %v656 = vadd.f32 %v288, %v655
    %v657 = vpop.f32.mrf.mxu0
    %v658 = vadd.f32 %v288, %v657
    %659 = vmatprep.mubr.bf16.mxu0 0
    %660 = vmatmul.mubr.bf16.gmra.mxu0 %v427
    %v661 = vpop.f32.mrf.mxu0
    %v662 = vadd.f32 %v293, %v661
    %v663 = vpop.f32.mrf.mxu0
    %v664 = vadd.f32 %v293, %v663
    %v665 = vpop.f32.mrf.mxu0
    %v666 = vadd.f32 %v298, %v665
    %v667 = vpop.f32.mrf.mxu0
    %v668 = vadd.f32 %v298, %v667
    %669 = vdwg.mxu0
    %v670 = vmax.f32 %v512, 0.0
    %v671 = vmax.f32 %v514, 0.0
    %v672 = vmax.f32 %v516, 0.0
    %v673 = vmax.f32 %v518, 0.0
    %v674 = vmax.f32 %v522, 0.0
    %v675 = vmax.f32 %v524, 0.0
    %v676 = vmax.f32 %v526, 0.0
    %v677 = vmax.f32 %v528, 0.0
    %v678 = vmax.f32 %v532, 0.0
    %v679 = vmax.f32 %v534, 0.0
    %v680 = vmax.f32 %v536, 0.0
    %v681 = vmax.f32 %v538, 0.0
    %v682 = vmax.f32 %v542, 0.0
    %v683 = vmax.f32 %v544, 0.0
    %v684 = vmax.f32 %v546, 0.0
    %v685 = vmax.f32 %v548, 0.0
    %v686 = vmax.f32 %v552, 0.0
    %v687 = vmax.f32 %v554, 0.0
    %v688 = vmax.f32 %v556, 0.0
    %v689 = vmax.f32 %v558, 0.0
    %v690 = vmax.f32 %v562, 0.0
    %v691 = vmax.f32 %v564, 0.0
    %v692 = vmax.f32 %v566, 0.0
    %v693 = vmax.f32 %v568, 0.0
    %v694 = vmax.f32 %v572, 0.0
    %v695 = vmax.f32 %v574, 0.0
    %v696 = vmax.f32 %v576, 0.0
    %v697 = vmax.f32 %v578, 0.0
    %v698 = vmax.f32 %v582, 0.0
    %v699 = vmax.f32 %v584, 0.0
    %v700 = vmax.f32 %v586, 0.0
    %v701 = vmax.f32 %v588, 0.0
    %v702 = vmax.f32 %v592, 0.0
    %v703 = vmax.f32 %v594, 0.0
    %v704 = vmax.f32 %v596, 0.0
    %v705 = vmax.f32 %v598, 0.0
    %v706 = vmax.f32 %v602, 0.0
    %v707 = vmax.f32 %v604, 0.0
    %v708 = vmax.f32 %v606, 0.0
    %v709 = vmax.f32 %v608, 0.0
    %v710 = vmax.f32 %v612, 0.0
    %v711 = vmax.f32 %v614, 0.0
    %v712 = vmax.f32 %v616, 0.0
    %v713 = vmax.f32 %v618, 0.0
    %v714 = vmax.f32 %v622, 0.0
    %v715 = vmax.f32 %v624, 0.0
    %v716 = vmax.f32 %v626, 0.0
    %v717 = vmax.f32 %v628, 0.0
    %v718 = vmax.f32 %v632, 0.0
    %v719 = vmax.f32 %v634, 0.0
    %v720 = vmax.f32 %v636, 0.0
    %v721 = vmax.f32 %v638, 0.0
    %v722 = vmax.f32 %v642, 0.0
    %v723 = vmax.f32 %v644, 0.0
    %v724 = vmax.f32 %v646, 0.0
    %v725 = vmax.f32 %v648, 0.0
    %v726 = vmax.f32 %v652, 0.0
    %v727 = vmax.f32 %v654, 0.0
    %v728 = vmax.f32 %v656, 0.0
    %v729 = vmax.f32 %v658, 0.0
    %v730 = vmax.f32 %v662, 0.0
    %v731 = vmax.f32 %v664, 0.0
    %v732 = vmax.f32 %v666, 0.0
    %v733 = vmax.f32 %v668, 0.0
    %v734 = vld [vmem:[%s3] sm:$0xff]
    %v735 = vld [vmem:[%s3 + $0x8] sm:$0xff]
    %v736 = vld [vmem:[%s3 + $0x10] sm:$0xff]
    %v737 = vld [vmem:[%s3 + $0x18] sm:$0xff]
    %v738 = vld [vmem:[%s3 + $0x20] sm:$0xff]
    %v739 = vld [vmem:[%s3 + $0x28] sm:$0xff]
    %v740 = vld [vmem:[%s3 + $0x30] sm:$0xff]
    %v741 = vld [vmem:[%s3 + $0x38] sm:$0xff]
    %v742 = vld [vmem:[%s3 + $0x40] sm:$0xff]
    %v743 = vld [vmem:[%s3 + $0x48] sm:$0xff]
    %v744 = vld [vmem:[%s3 + $0x50] sm:$0xff]
    %v745 = vld [vmem:[%s3 + $0x58] sm:$0xff]
    %v746 = vld [vmem:[%s3 + $0x60] sm:$0xff]
    %v747 = vld [vmem:[%s3 + $0x68] sm:$0xff]
    %v748 = vld [vmem:[%s3 + $0x70] sm:$0xff]
    %v749 = vld [vmem:[%s3 + $0x78] sm:$0xff]
    %v750 = vld [vmem:[%s3 + $0x80] sm:$0xff]
    %v751 = vld [vmem:[%s3 + $0x88] sm:$0xff]
    %v752 = vld [vmem:[%s3 + $0x90] sm:$0xff]
    %v753 = vld [vmem:[%s3 + $0x98] sm:$0xff]
    %v754 = vld [vmem:[%s3 + $0xa0] sm:$0xff]
    %v755 = vld [vmem:[%s3 + $0xa8] sm:$0xff]
    %v756 = vld [vmem:[%s3 + $0xb0] sm:$0xff]
    %v757 = vld [vmem:[%s3 + $0xb8] sm:$0xff]
    %v758 = vld [vmem:[%s3 + $0xc0] sm:$0xff]
    %v759 = vld [vmem:[%s3 + $0xc8] sm:$0xff]
    %v760 = vld [vmem:[%s3 + $0xd0] sm:$0xff]
    %v761 = vld [vmem:[%s3 + $0xd8] sm:$0xff]
    %v762 = vld [vmem:[%s3 + $0xe0] sm:$0xff]
    %v763 = vld [vmem:[%s3 + $0xe8] sm:$0xff]
    %v764 = vld [vmem:[%s3 + $0xf0] sm:$0xff]
    %v765 = vld [vmem:[%s3 + $0xf8] sm:$0xff]
    %v766 = vpack.c.bf16 %v672, %v670
    %v767 = vpack.c.bf16 %v673, %v671
    %v768 = vpack.c.bf16 %v676, %v674
    %v769 = vpack.c.bf16 %v677, %v675
    %v770 = vpack.c.bf16 %v680, %v678
    %v771 = vpack.c.bf16 %v681, %v679
    %v772 = vpack.c.bf16 %v684, %v682
    %v773 = vpack.c.bf16 %v685, %v683
    %v774 = vpack.c.bf16 %v688, %v686
    %v775 = vpack.c.bf16 %v689, %v687
    %v776 = vpack.c.bf16 %v692, %v690
    %v777 = vpack.c.bf16 %v693, %v691
    %v778 = vpack.c.bf16 %v696, %v694
    %v779 = vpack.c.bf16 %v697, %v695
    %v780 = vpack.c.bf16 %v700, %v698
    %v781 = vpack.c.bf16 %v701, %v699
    %v782 = vpack.c.bf16 %v704, %v702
    %v783 = vpack.c.bf16 %v705, %v703
    %v784 = vpack.c.bf16 %v708, %v706
    %v785 = vpack.c.bf16 %v709, %v707
    %v786 = vpack.c.bf16 %v712, %v710
    %v787 = vpack.c.bf16 %v713, %v711
    %v788 = vpack.c.bf16 %v716, %v714
    %v789 = vpack.c.bf16 %v717, %v715
    %v790 = vpack.c.bf16 %v720, %v718
    %v791 = vpack.c.bf16 %v721, %v719
    %v792 = vpack.c.bf16 %v724, %v722
    %v793 = vpack.c.bf16 %v725, %v723
    %v794 = vpack.c.bf16 %v728, %v726
    %v795 = vpack.c.bf16 %v729, %v727
    %v796 = vpack.c.bf16 %v732, %v730
    %v797 = vpack.c.bf16 %v733, %v731
    %v798 = vld [vmem:[%s4] sm:$0xff]
    %v799 = vld [vmem:[%s4 + $0x8] sm:$0xff]
    %v800 = vld [vmem:[%s4 + $0x10] sm:$0xff]
    %v801 = vld [vmem:[%s4 + $0x18] sm:$0xff]
    %v802 = vld [vmem:[%s4 + $0x20] sm:$0xff]
    %v803 = vld [vmem:[%s4 + $0x28] sm:$0xff]
    %v804 = vld [vmem:[%s4 + $0x30] sm:$0xff]
    %v805 = vld [vmem:[%s4 + $0x38] sm:$0xff]
    %v806 = vld [vmem:[%s4 + $0x40] sm:$0xff]
    %v807 = vld [vmem:[%s4 + $0x48] sm:$0xff]
    %v808 = vld [vmem:[%s4 + $0x50] sm:$0xff]
    %v809 = vld [vmem:[%s4 + $0x58] sm:$0xff]
    %v810 = vld [vmem:[%s4 + $0x60] sm:$0xff]
    %v811 = vld [vmem:[%s4 + $0x68] sm:$0xff]
    %v812 = vld [vmem:[%s4 + $0x70] sm:$0xff]
    %v813 = vld [vmem:[%s4 + $0x78] sm:$0xff]
    %v814 = vld [vmem:[%s4 + $0x80] sm:$0xff]
    %v815 = vld [vmem:[%s4 + $0x88] sm:$0xff]
    %v816 = vld [vmem:[%s4 + $0x90] sm:$0xff]
    %v817 = vld [vmem:[%s4 + $0x98] sm:$0xff]
    %v818 = vld [vmem:[%s4 + $0xa0] sm:$0xff]
    %v819 = vld [vmem:[%s4 + $0xa8] sm:$0xff]
    %v820 = vld [vmem:[%s4 + $0xb0] sm:$0xff]
    %v821 = vld [vmem:[%s4 + $0xb8] sm:$0xff]
    %v822 = vld [vmem:[%s4 + $0xc0] sm:$0xff]
    %v823 = vld [vmem:[%s4 + $0xc8] sm:$0xff]
    %v824 = vld [vmem:[%s4 + $0xd0] sm:$0xff]
    %v825 = vld [vmem:[%s4 + $0xd8] sm:$0xff]
    %v826 = vld [vmem:[%s4 + $0xe0] sm:$0xff]
    %v827 = vld [vmem:[%s4 + $0xe8] sm:$0xff]
    %v828 = vld [vmem:[%s4 + $0xf0] sm:$0xff]
    %v829 = vld [vmem:[%s4 + $0xf8] sm:$0xff]
    %831 = vset.pattern.permute.xlu0 0
    %832 = vperm.xlu0 %831, %v798
    %v833 = vpop.permute.xlu0 %832
    %836 = vset.pattern.permute.xlu0 0
    %837 = vperm.xlu0 %836, %v799
    %v838 = vpop.permute.xlu0 %837
    %841 = vset.pattern.permute.xlu0 0
    %842 = vperm.xlu0 %841, %v800
    %v843 = vpop.permute.xlu0 %842
    %846 = vset.pattern.permute.xlu0 0
    %847 = vperm.xlu0 %846, %v801
    %v848 = vpop.permute.xlu0 %847
    %851 = vset.pattern.permute.xlu0 0
    %852 = vperm.xlu0 %851, %v802
    %v853 = vpop.permute.xlu0 %852
    %856 = vset.pattern.permute.xlu0 0
    %857 = vperm.xlu0 %856, %v803
    %v858 = vpop.permute.xlu0 %857
    %861 = vset.pattern.permute.xlu0 0
    %862 = vperm.xlu0 %861, %v804
    %v863 = vpop.permute.xlu0 %862
    %866 = vset.pattern.permute.xlu0 0
    %867 = vperm.xlu0 %866, %v805
    %v868 = vpop.permute.xlu0 %867
    %871 = vset.pattern.permute.xlu0 0
    %872 = vperm.xlu0 %871, %v806
    %v873 = vpop.permute.xlu0 %872
    %876 = vset.pattern.permute.xlu0 0
    %877 = vperm.xlu0 %876, %v807
    %v878 = vpop.permute.xlu0 %877
    %881 = vset.pattern.permute.xlu0 0
    %882 = vperm.xlu0 %881, %v808
    %v883 = vpop.permute.xlu0 %882
    %886 = vset.pattern.permute.xlu0 0
    %887 = vperm.xlu0 %886, %v809
    %v888 = vpop.permute.xlu0 %887
    %891 = vset.pattern.permute.xlu0 0
    %892 = vperm.xlu0 %891, %v810
    %v893 = vpop.permute.xlu0 %892
    %896 = vset.pattern.permute.xlu0 0
    %897 = vperm.xlu0 %896, %v811
    %v898 = vpop.permute.xlu0 %897
    %901 = vset.pattern.permute.xlu0 0
    %902 = vperm.xlu0 %901, %v812
    %v903 = vpop.permute.xlu0 %902
    %906 = vset.pattern.permute.xlu0 0
    %907 = vperm.xlu0 %906, %v813
    %v908 = vpop.permute.xlu0 %907
    %911 = vset.pattern.permute.xlu0 0
    %912 = vperm.xlu0 %911, %v814
    %v913 = vpop.permute.xlu0 %912
    %916 = vset.pattern.permute.xlu0 0
    %917 = vperm.xlu0 %916, %v815
    %v918 = vpop.permute.xlu0 %917
    %921 = vset.pattern.permute.xlu0 0
    %922 = vperm.xlu0 %921, %v816
    %v923 = vpop.permute.xlu0 %922
    %926 = vset.pattern.permute.xlu0 0
    %927 = vperm.xlu0 %926, %v817
    %v928 = vpop.permute.xlu0 %927
    %931 = vset.pattern.permute.xlu0 0
    %932 = vperm.xlu0 %931, %v818
    %v933 = vpop.permute.xlu0 %932
    %936 = vset.pattern.permute.xlu0 0
    %937 = vperm.xlu0 %936, %v819
    %v938 = vpop.permute.xlu0 %937
    %941 = vset.pattern.permute.xlu0 0
    %942 = vperm.xlu0 %941, %v820
    %v943 = vpop.permute.xlu0 %942
    %946 = vset.pattern.permute.xlu0 0
    %947 = vperm.xlu0 %946, %v821
    %v948 = vpop.permute.xlu0 %947
    %951 = vset.pattern.permute.xlu0 0
    %952 = vperm.xlu0 %951, %v822
    %v953 = vpop.permute.xlu0 %952
    %956 = vset.pattern.permute.xlu0 0
    %957 = vperm.xlu0 %956, %v823
    %v958 = vpop.permute.xlu0 %957
    %961 = vset.pattern.permute.xlu0 0
    %962 = vperm.xlu0 %961, %v824
    %v963 = vpop.permute.xlu0 %962
    %966 = vset.pattern.permute.xlu0 0
    %967 = vperm.xlu0 %966, %v825
    %v968 = vpop.permute.xlu0 %967
    %971 = vset.pattern.permute.xlu0 0
    %972 = vperm.xlu0 %971, %v826
    %v973 = vpop.permute.xlu0 %972
    %976 = vset.pattern.permute.xlu0 0
    %977 = vperm.xlu0 %976, %v827
    %v978 = vpop.permute.xlu0 %977
    %981 = vset.pattern.permute.xlu0 0
    %982 = vperm.xlu0 %981, %v828
    %v983 = vpop.permute.xlu0 %982
    %986 = vset.pattern.permute.xlu0 0
    %987 = vperm.xlu0 %986, %v829
    %v988 = vpop.permute.xlu0 %987
    %v1022 = vunpack.c.l.b16 %v734
    %v1023 = vunpack.c.h.b16 %v734
    %v1024 = vunpack.c.l.b16 %v735
    %v1025 = vunpack.c.h.b16 %v735
    %v1026 = vunpack.c.l.b16 %v736
    %v1027 = vunpack.c.h.b16 %v736
    %v1028 = vunpack.c.l.b16 %v737
    %v1029 = vunpack.c.h.b16 %v737
    %v1030 = vunpack.c.l.b16 %v738
    %v1031 = vunpack.c.h.b16 %v738
    %v1032 = vunpack.c.l.b16 %v739
    %v1033 = vunpack.c.h.b16 %v739
    %v1034 = vunpack.c.l.b16 %v740
    %v1035 = vunpack.c.h.b16 %v740
    %v1036 = vunpack.c.l.b16 %v741
    %v1037 = vunpack.c.h.b16 %v741
    %v1038 = vunpack.c.l.b16 %v742
    %v1039 = vunpack.c.h.b16 %v742
    %v1040 = vunpack.c.l.b16 %v743
    %v1041 = vunpack.c.h.b16 %v743
    %v1042 = vunpack.c.l.b16 %v744
    %v1043 = vunpack.c.h.b16 %v744
    %v1044 = vunpack.c.l.b16 %v745
    %v1045 = vunpack.c.h.b16 %v745
    %v1046 = vunpack.c.l.b16 %v746
    %v1047 = vunpack.c.h.b16 %v746
    %v1048 = vunpack.c.l.b16 %v747
    %v1049 = vunpack.c.h.b16 %v747
    %v1050 = vunpack.c.l.b16 %v748
    %v1051 = vunpack.c.h.b16 %v748
    %v1052 = vunpack.c.l.b16 %v749
    %v1053 = vunpack.c.h.b16 %v749
    %v1054 = vunpack.c.l.b16 %v750
    %v1055 = vunpack.c.h.b16 %v750
    %v1056 = vunpack.c.l.b16 %v751
    %v1057 = vunpack.c.h.b16 %v751
    %v1058 = vunpack.c.l.b16 %v752
    %v1059 = vunpack.c.h.b16 %v752
    %v1060 = vunpack.c.l.b16 %v753
    %v1061 = vunpack.c.h.b16 %v753
    %v1062 = vunpack.c.l.b16 %v754
    %v1063 = vunpack.c.h.b16 %v754
    %v1064 = vunpack.c.l.b16 %v755
    %v1065 = vunpack.c.h.b16 %v755
    %v1066 = vunpack.c.l.b16 %v756
    %v1067 = vunpack.c.h.b16 %v756
    %v1068 = vunpack.c.l.b16 %v757
    %v1069 = vunpack.c.h.b16 %v757
    %v1070 = vunpack.c.l.b16 %v758
    %v1071 = vunpack.c.h.b16 %v758
    %v1072 = vunpack.c.l.b16 %v759
    %v1073 = vunpack.c.h.b16 %v759
    %v1074 = vunpack.c.l.b16 %v760
    %v1075 = vunpack.c.h.b16 %v760
    %v1076 = vunpack.c.l.b16 %v761
    %v1077 = vunpack.c.h.b16 %v761
    %v1078 = vunpack.c.l.b16 %v762
    %v1079 = vunpack.c.h.b16 %v762
    %v1080 = vunpack.c.l.b16 %v763
    %v1081 = vunpack.c.h.b16 %v763
    %v1082 = vunpack.c.l.b16 %v764
    %v1083 = vunpack.c.h.b16 %v764
    %v1084 = vunpack.c.l.b16 %v765
    %v1085 = vunpack.c.h.b16 %v765
    %v1086 = vpack.c.b16 %v1024, %v1022
    %v1087 = vpack.c.b16 %v1025, %v1023
    %v1088 = vpack.c.b16 %v1028, %v1026
    %v1089 = vpack.c.b16 %v1029, %v1027
    %v1090 = vpack.c.b16 %v1032, %v1030
    %v1091 = vpack.c.b16 %v1033, %v1031
    %v1092 = vpack.c.b16 %v1036, %v1034
    %v1093 = vpack.c.b16 %v1037, %v1035
    %v1094 = vpack.c.b16 %v1040, %v1038
    %v1095 = vpack.c.b16 %v1041, %v1039
    %v1096 = vpack.c.b16 %v1044, %v1042
    %v1097 = vpack.c.b16 %v1045, %v1043
    %v1098 = vpack.c.b16 %v1048, %v1046
    %v1099 = vpack.c.b16 %v1049, %v1047
    %v1100 = vpack.c.b16 %v1052, %v1050
    %v1101 = vpack.c.b16 %v1053, %v1051
    %v1102 = vpack.c.b16 %v1056, %v1054
    %v1103 = vpack.c.b16 %v1057, %v1055
    %v1104 = vpack.c.b16 %v1060, %v1058
    %v1105 = vpack.c.b16 %v1061, %v1059
    %v1106 = vpack.c.b16 %v1064, %v1062
    %v1107 = vpack.c.b16 %v1065, %v1063
    %v1108 = vpack.c.b16 %v1068, %v1066
    %v1109 = vpack.c.b16 %v1069, %v1067
    %v1110 = vpack.c.b16 %v1072, %v1070
    %v1111 = vpack.c.b16 %v1073, %v1071
    %v1112 = vpack.c.b16 %v1076, %v1074
    %v1113 = vpack.c.b16 %v1077, %v1075
    %v1114 = vpack.c.b16 %v1080, %v1078
    %v1115 = vpack.c.b16 %v1081, %v1079
    %v1116 = vpack.c.b16 %v1084, %v1082
    %v1117 = vpack.c.b16 %v1085, %v1083
    %1150 = vmatprep.subr.bf16.mxu0 %v781
    %1151 = vmatpush1.bf16.msra.mxu0 %v780
    %1152 = vmatprep.subr.bf16.mxu0 %v779
    %1153 = vmatpush1.bf16.msra.mxu0 %v778
    %1154 = vmatprep.subr.bf16.mxu0 %v777
    %1155 = vmatpush1.bf16.msra.mxu0 %v776
    %1156 = vmatprep.subr.bf16.mxu0 %v775
    %1157 = vmatpush1.bf16.msra.mxu0 %v774
    %1158 = vmatprep.subr.bf16.mxu0 %v773
    %1159 = vmatpush1.bf16.msra.mxu0 %v772
    %1160 = vmatprep.subr.bf16.mxu0 %v771
    %1161 = vmatpush1.bf16.msra.mxu0 %v770
    %1162 = vmatprep.subr.bf16.mxu0 %v769
    %1163 = vmatpush1.bf16.msra.mxu0 %v768
    %1164 = vmatprep.subr.bf16.mxu0 %v767
    %1165 = vmatpush1.bf16.msra.mxu0 %v766
    %1166 = vmatprep.subr.bf16.mxu0 %v797
    %1167 = vmatpush2.bf16.msra.mxu0 %v796
    %1168 = vmatprep.subr.bf16.mxu0 %v795
    %1169 = vmatpush2.bf16.msra.mxu0 %v794
    %1170 = vmatprep.subr.bf16.mxu0 %v793
    %1171 = vmatpush2.bf16.msra.mxu0 %v792
    %1172 = vmatprep.subr.bf16.mxu0 %v791
    %1173 = vmatpush2.bf16.msra.mxu0 %v790
    %1174 = vmatprep.subr.bf16.mxu0 %v789
    %1175 = vmatpush2.bf16.msra.mxu0 %v788
    %1176 = vmatprep.subr.bf16.mxu0 %v787
    %1177 = vmatpush2.bf16.msra.mxu0 %v786
    %1178 = vmatprep.subr.bf16.mxu0 %v785
    %1179 = vmatpush2.bf16.msra.mxu0 %v784
    %1180 = vmatprep.subr.bf16.mxu0 %v783
    %1181 = vmatpush2.bf16.msra.mxu0 %v782
    %1182 = vmatprep.mubr.bf16.mxu0 %v1087
    %1183 = vmatmul.mubr.bf16.gmra.mxu0 %v1086
    %v1184 = vpop.f32.mrf.mxu0
    %v1185 = vadd.f32 %v833, %v1184
    %v1186 = vpop.f32.mrf.mxu0
    %v1187 = vadd.f32 %v833, %v1186
    %v1188 = vpop.f32.mrf.mxu0
    %v1189 = vadd.f32 %v838, %v1188
    %v1190 = vpop.f32.mrf.mxu0
    %v1191 = vadd.f32 %v838, %v1190
    %1192 = vmatprep.mubr.bf16.mxu0 %v1089
    %1193 = vmatmul.mubr.bf16.gmra.mxu0 %v1088
    %v1194 = vpop.f32.mrf.mxu0
    %v1195 = vadd.f32 %v843, %v1194
    %v1196 = vpop.f32.mrf.mxu0
    %v1197 = vadd.f32 %v843, %v1196
    %v1198 = vpop.f32.mrf.mxu0
    %v1199 = vadd.f32 %v848, %v1198
    %v1200 = vpop.f32.mrf.mxu0
    %v1201 = vadd.f32 %v848, %v1200
    %1202 = vmatprep.mubr.bf16.mxu0 %v1091
    %1203 = vmatmul.mubr.bf16.gmra.mxu0 %v1090
    %v1204 = vpop.f32.mrf.mxu0
    %v1205 = vadd.f32 %v853, %v1204
    %v1206 = vpop.f32.mrf.mxu0
    %v1207 = vadd.f32 %v853, %v1206
    %v1208 = vpop.f32.mrf.mxu0
    %v1209 = vadd.f32 %v858, %v1208
    %v1210 = vpop.f32.mrf.mxu0
    %v1211 = vadd.f32 %v858, %v1210
    %1212 = vmatprep.mubr.bf16.mxu0 %v1093
    %1213 = vmatmul.mubr.bf16.gmra.mxu0 %v1092
    %v1214 = vpop.f32.mrf.mxu0
    %v1215 = vadd.f32 %v863, %v1214
    %v1216 = vpop.f32.mrf.mxu0
    %v1217 = vadd.f32 %v863, %v1216
    %v1218 = vpop.f32.mrf.mxu0
    %v1219 = vadd.f32 %v868, %v1218
    %v1220 = vpop.f32.mrf.mxu0
    %v1221 = vadd.f32 %v868, %v1220
    %1222 = vmatprep.mubr.bf16.mxu0 %v1095
    %1223 = vmatmul.mubr.bf16.gmra.mxu0 %v1094
    %v1224 = vpop.f32.mrf.mxu0
    %v1225 = vadd.f32 %v873, %v1224
    %v1226 = vpop.f32.mrf.mxu0
    %v1227 = vadd.f32 %v873, %v1226
    %v1228 = vpop.f32.mrf.mxu0
    %v1229 = vadd.f32 %v878, %v1228
    %v1230 = vpop.f32.mrf.mxu0
    %v1231 = vadd.f32 %v878, %v1230
    %1232 = vmatprep.mubr.bf16.mxu0 %v1097
    %1233 = vmatmul.mubr.bf16.gmra.mxu0 %v1096
    %v1234 = vpop.f32.mrf.mxu0
    %v1235 = vadd.f32 %v883, %v1234
    %v1236 = vpop.f32.mrf.mxu0
    %v1237 = vadd.f32 %v883, %v1236
    %v1238 = vpop.f32.mrf.mxu0
    %v1239 = vadd.f32 %v888, %v1238
    %v1240 = vpop.f32.mrf.mxu0
    %v1241 = vadd.f32 %v888, %v1240
    %1242 = vmatprep.mubr.bf16.mxu0 %v1099
    %1243 = vmatmul.mubr.bf16.gmra.mxu0 %v1098
    %v1244 = vpop.f32.mrf.mxu0
    %v1245 = vadd.f32 %v893, %v1244
    %v1246 = vpop.f32.mrf.mxu0
    %v1247 = vadd.f32 %v893, %v1246
    %v1248 = vpop.f32.mrf.mxu0
    %v1249 = vadd.f32 %v898, %v1248
    %v1250 = vpop.f32.mrf.mxu0
    %v1251 = vadd.f32 %v898, %v1250
    %1252 = vmatprep.mubr.bf16.mxu0 %v1101
    %1253 = vmatmul.mubr.bf16.gmra.mxu0 %v1100
    %v1254 = vpop.f32.mrf.mxu0
    %v1255 = vadd.f32 %v903, %v1254
    %v1256 = vpop.f32.mrf.mxu0
    %v1257 = vadd.f32 %v903, %v1256
    %v1258 = vpop.f32.mrf.mxu0
    %v1259 = vadd.f32 %v908, %v1258
    %v1260 = vpop.f32.mrf.mxu0
    %v1261 = vadd.f32 %v908, %v1260
    %1262 = vmatprep.mubr.bf16.mxu0 %v1103
    %1263 = vmatmul.mubr.bf16.gmra.mxu0 %v1102
    %v1264 = vpop.f32.mrf.mxu0
    %v1265 = vadd.f32 %v913, %v1264
    %v1266 = vpop.f32.mrf.mxu0
    %v1267 = vadd.f32 %v913, %v1266
    %v1268 = vpop.f32.mrf.mxu0
    %v1269 = vadd.f32 %v918, %v1268
    %v1270 = vpop.f32.mrf.mxu0
    %v1271 = vadd.f32 %v918, %v1270
    %1272 = vmatprep.mubr.bf16.mxu0 %v1105
    %1273 = vmatmul.mubr.bf16.gmra.mxu0 %v1104
    %v1274 = vpop.f32.mrf.mxu0
    %v1275 = vadd.f32 %v923, %v1274
    %v1276 = vpop.f32.mrf.mxu0
    %v1277 = vadd.f32 %v923, %v1276
    %v1278 = vpop.f32.mrf.mxu0
    %v1279 = vadd.f32 %v928, %v1278
    %v1280 = vpop.f32.mrf.mxu0
    %v1281 = vadd.f32 %v928, %v1280
    %1282 = vmatprep.mubr.bf16.mxu0 %v1107
    %1283 = vmatmul.mubr.bf16.gmra.mxu0 %v1106
    %v1284 = vpop.f32.mrf.mxu0
    %v1285 = vadd.f32 %v933, %v1284
    %v1286 = vpop.f32.mrf.mxu0
    %v1287 = vadd.f32 %v933, %v1286
    %v1288 = vpop.f32.mrf.mxu0
    %v1289 = vadd.f32 %v938, %v1288
    %v1290 = vpop.f32.mrf.mxu0
    %v1291 = vadd.f32 %v938, %v1290
    %1292 = vmatprep.mubr.bf16.mxu0 %v1109
    %1293 = vmatmul.mubr.bf16.gmra.mxu0 %v1108
    %v1294 = vpop.f32.mrf.mxu0
    %v1295 = vadd.f32 %v943, %v1294
    %v1296 = vpop.f32.mrf.mxu0
    %v1297 = vadd.f32 %v943, %v1296
    %v1298 = vpop.f32.mrf.mxu0
    %v1299 = vadd.f32 %v948, %v1298
    %v1300 = vpop.f32.mrf.mxu0
    %v1301 = vadd.f32 %v948, %v1300
    %1302 = vmatprep.mubr.bf16.mxu0 %v1111
    %1303 = vmatmul.mubr.bf16.gmra.mxu0 %v1110
    %v1304 = vpop.f32.mrf.mxu0
    %v1305 = vadd.f32 %v953, %v1304
    %v1306 = vpop.f32.mrf.mxu0
    %v1307 = vadd.f32 %v953, %v1306
    %v1308 = vpop.f32.mrf.mxu0
    %v1309 = vadd.f32 %v958, %v1308
    %v1310 = vpop.f32.mrf.mxu0
    %v1311 = vadd.f32 %v958, %v1310
    %1312 = vmatprep.mubr.bf16.mxu0 %v1113
    %1313 = vmatmul.mubr.bf16.gmra.mxu0 %v1112
    %v1314 = vpop.f32.mrf.mxu0
    %v1315 = vadd.f32 %v963, %v1314
    %v1316 = vpop.f32.mrf.mxu0
    %v1317 = vadd.f32 %v963, %v1316
    %v1318 = vpop.f32.mrf.mxu0
    %v1319 = vadd.f32 %v968, %v1318
    %v1320 = vpop.f32.mrf.mxu0
    %v1321 = vadd.f32 %v968, %v1320
    %1322 = vmatprep.mubr.bf16.mxu0 %v1115
    %1323 = vmatmul.mubr.bf16.gmra.mxu0 %v1114
    %v1324 = vpop.f32.mrf.mxu0
    %v1325 = vadd.f32 %v973, %v1324
    %v1326 = vpop.f32.mrf.mxu0
    %v1327 = vadd.f32 %v973, %v1326
    %v1328 = vpop.f32.mrf.mxu0
    %v1329 = vadd.f32 %v978, %v1328
    %v1330 = vpop.f32.mrf.mxu0
    %v1331 = vadd.f32 %v978, %v1330
    %1332 = vmatprep.mubr.bf16.mxu0 %v1117
    %1333 = vmatmul.mubr.bf16.gmra.mxu0 %v1116
    %v1334 = vpop.f32.mrf.mxu0
    %v1335 = vadd.f32 %v983, %v1334
    %v1336 = vpop.f32.mrf.mxu0
    %v1337 = vadd.f32 %v983, %v1336
    %v1338 = vpop.f32.mrf.mxu0
    %v1339 = vadd.f32 %v988, %v1338
    %v1340 = vpop.f32.mrf.mxu0
    %v1341 = vadd.f32 %v988, %v1340
    %1342 = vdwg.mxu0
    %v1343 = vmax.f32 %v1185, 0.0
    %v1344 = vmax.f32 %v1187, 0.0
    %v1345 = vmax.f32 %v1189, 0.0
    %v1346 = vmax.f32 %v1191, 0.0
    %v1347 = vmax.f32 %v1195, 0.0
    %v1348 = vmax.f32 %v1197, 0.0
    %v1349 = vmax.f32 %v1199, 0.0
    %v1350 = vmax.f32 %v1201, 0.0
    %v1351 = vmax.f32 %v1205, 0.0
    %v1352 = vmax.f32 %v1207, 0.0
    %v1353 = vmax.f32 %v1209, 0.0
    %v1354 = vmax.f32 %v1211, 0.0
    %v1355 = vmax.f32 %v1215, 0.0
    %v1356 = vmax.f32 %v1217, 0.0
    %v1357 = vmax.f32 %v1219, 0.0
    %v1358 = vmax.f32 %v1221, 0.0
    %v1359 = vmax.f32 %v1225, 0.0
    %v1360 = vmax.f32 %v1227, 0.0
    %v1361 = vmax.f32 %v1229, 0.0
    %v1362 = vmax.f32 %v1231, 0.0
    %v1363 = vmax.f32 %v1235, 0.0
    %v1364 = vmax.f32 %v1237, 0.0
    %v1365 = vmax.f32 %v1239, 0.0
    %v1366 = vmax.f32 %v1241, 0.0
    %v1367 = vmax.f32 %v1245, 0.0
    %v1368 = vmax.f32 %v1247, 0.0
    %v1369 = vmax.f32 %v1249, 0.0
    %v1370 = vmax.f32 %v1251, 0.0
    %v1371 = vmax.f32 %v1255, 0.0
    %v1372 = vmax.f32 %v1257, 0.0
    %v1373 = vmax.f32 %v1259, 0.0
    %v1374 = vmax.f32 %v1261, 0.0
    %v1375 = vmax.f32 %v1265, 0.0
    %v1376 = vmax.f32 %v1267, 0.0
    %v1377 = vmax.f32 %v1269, 0.0
    %v1378 = vmax.f32 %v1271, 0.0
    %v1379 = vmax.f32 %v1275, 0.0
    %v1380 = vmax.f32 %v1277, 0.0
    %v1381 = vmax.f32 %v1279, 0.0
    %v1382 = vmax.f32 %v1281, 0.0
    %v1383 = vmax.f32 %v1285, 0.0
    %v1384 = vmax.f32 %v1287, 0.0
    %v1385 = vmax.f32 %v1289, 0.0
    %v1386 = vmax.f32 %v1291, 0.0
    %v1387 = vmax.f32 %v1295, 0.0
    %v1388 = vmax.f32 %v1297, 0.0
    %v1389 = vmax.f32 %v1299, 0.0
    %v1390 = vmax.f32 %v1301, 0.0
    %v1391 = vmax.f32 %v1305, 0.0
    %v1392 = vmax.f32 %v1307, 0.0
    %v1393 = vmax.f32 %v1309, 0.0
    %v1394 = vmax.f32 %v1311, 0.0
    %v1395 = vmax.f32 %v1315, 0.0
    %v1396 = vmax.f32 %v1317, 0.0
    %v1397 = vmax.f32 %v1319, 0.0
    %v1398 = vmax.f32 %v1321, 0.0
    %v1399 = vmax.f32 %v1325, 0.0
    %v1400 = vmax.f32 %v1327, 0.0
    %v1401 = vmax.f32 %v1329, 0.0
    %v1402 = vmax.f32 %v1331, 0.0
    %v1403 = vmax.f32 %v1335, 0.0
    %v1404 = vmax.f32 %v1337, 0.0
    %v1405 = vmax.f32 %v1339, 0.0
    %v1406 = vmax.f32 %v1341, 0.0
    %v1407 = vld [vmem:[%s5] sm:$0xff]
    %v1408 = vpack.c.bf16 %v1345, %v1343
    %v1409 = vpack.c.bf16 %v1346, %v1344
    %v1410 = vpack.c.bf16 %v1349, %v1347
    %v1411 = vpack.c.bf16 %v1350, %v1348
    %v1412 = vpack.c.bf16 %v1353, %v1351
    %v1413 = vpack.c.bf16 %v1354, %v1352
    %v1414 = vpack.c.bf16 %v1357, %v1355
    %v1415 = vpack.c.bf16 %v1358, %v1356
    %v1416 = vpack.c.bf16 %v1361, %v1359
    %v1417 = vpack.c.bf16 %v1362, %v1360
    %v1418 = vpack.c.bf16 %v1365, %v1363
    %v1419 = vpack.c.bf16 %v1366, %v1364
    %v1420 = vpack.c.bf16 %v1369, %v1367
    %v1421 = vpack.c.bf16 %v1370, %v1368
    %v1422 = vpack.c.bf16 %v1373, %v1371
    %v1423 = vpack.c.bf16 %v1374, %v1372
    %v1424 = vpack.c.bf16 %v1377, %v1375
    %v1425 = vpack.c.bf16 %v1378, %v1376
    %v1426 = vpack.c.bf16 %v1381, %v1379
    %v1427 = vpack.c.bf16 %v1382, %v1380
    %v1428 = vpack.c.bf16 %v1385, %v1383
    %v1429 = vpack.c.bf16 %v1386, %v1384
    %v1430 = vpack.c.bf16 %v1389, %v1387
    %v1431 = vpack.c.bf16 %v1390, %v1388
    %v1432 = vpack.c.bf16 %v1393, %v1391
    %v1433 = vpack.c.bf16 %v1394, %v1392
    %v1434 = vpack.c.bf16 %v1397, %v1395
    %v1435 = vpack.c.bf16 %v1398, %v1396
    %v1436 = vpack.c.bf16 %v1401, %v1399
    %v1437 = vpack.c.bf16 %v1402, %v1400
    %v1438 = vpack.c.bf16 %v1405, %v1403
    %v1439 = vpack.c.bf16 %v1406, %v1404
    %v1440 = vld [vmem:[%s6] sm:$0xff]
    %1442 = vset.pattern.permute.xlu0 0
    %1443 = vperm.xlu0 %1442, %v1440
    %v1444 = vpop.permute.xlu0 %1443
    %v1447 = vunpack.c.l.b16 %v1407
    %v1448 = vunpack.c.h.b16 %v1407
    %v1449 = vpack.c.b16 %v1447, %v1447
    %v1450 = vpack.c.b16 %v1448, %v1448
    %1453 = vmatprep.subr.bf16.mxu0 %v1423
    %1454 = vmatpush1.bf16.msra.mxu0 %v1422
    %1455 = vmatprep.subr.bf16.mxu0 %v1421
    %1456 = vmatpush1.bf16.msra.mxu0 %v1420
    %1457 = vmatprep.subr.bf16.mxu0 %v1419
    %1458 = vmatpush1.bf16.msra.mxu0 %v1418
    %1459 = vmatprep.subr.bf16.mxu0 %v1417
    %1460 = vmatpush1.bf16.msra.mxu0 %v1416
    %1461 = vmatprep.subr.bf16.mxu0 %v1415
    %1462 = vmatpush1.bf16.msra.mxu0 %v1414
    %1463 = vmatprep.subr.bf16.mxu0 %v1413
    %1464 = vmatpush1.bf16.msra.mxu0 %v1412
    %1465 = vmatprep.subr.bf16.mxu0 %v1411
    %1466 = vmatpush1.bf16.msra.mxu0 %v1410
    %1467 = vmatprep.subr.bf16.mxu0 %v1409
    %1468 = vmatpush1.bf16.msra.mxu0 %v1408
    %1469 = vmatprep.subr.bf16.mxu0 %v1439
    %1470 = vmatpush2.bf16.msra.mxu0 %v1438
    %1471 = vmatprep.subr.bf16.mxu0 %v1437
    %1472 = vmatpush2.bf16.msra.mxu0 %v1436
    %1473 = vmatprep.subr.bf16.mxu0 %v1435
    %1474 = vmatpush2.bf16.msra.mxu0 %v1434
    %1475 = vmatprep.subr.bf16.mxu0 %v1433
    %1476 = vmatpush2.bf16.msra.mxu0 %v1432
    %1477 = vmatprep.subr.bf16.mxu0 %v1431
    %1478 = vmatpush2.bf16.msra.mxu0 %v1430
    %1479 = vmatprep.subr.bf16.mxu0 %v1429
    %1480 = vmatpush2.bf16.msra.mxu0 %v1428
    %1481 = vmatprep.subr.bf16.mxu0 %v1427
    %1482 = vmatpush2.bf16.msra.mxu0 %v1426
    %1483 = vmatprep.subr.bf16.mxu0 %v1425
    %1484 = vmatpush2.bf16.msra.mxu0 %v1424
    %1485 = vmatprep.mubr.bf16.mxu0 %v1450
    %1486 = vmatmul.mubr.bf16.gmra.mxu0 %v1449
    %v1487 = vpop.f32.mrf.mxu0
    %v1488 = vadd.f32 %v1444, %v1487
    %v1489 = vpop.f32.mrf.mxu0
    %v1490 = vadd.f32 %v1444, %v1489
    %v1491 = vpop.f32.mrf.mxu0
    %v1492 = vpop.f32.mrf.mxu0
    %1493 = vdwg.mxu0
    %v1496 = vcombine.low %v1488, %v1490
    %v1498 = vunpack.c.l.s4 1966171168
    %v1499 = vunpack.c.0.s8 %v1498
    %v1500 = vlaneseq
    %v1501 = vshrl.u32 %v1500, 7
    %v1502 = vsub.s32 %v1499, %v1501
    %v1503 = vrot.slane %v1496, %v1502
    %v1505 = vunpack.c.l.s4 1966171168
    %v1506 = vunpack.c.0.s8 %v1505
    %v1507 = vlaneseq
    %v1508 = vshrl.u32 %v1507, 7
    %v1509 = vsub.s32 %v1506, %v1508
    %v1510 = vrot.slane %v1503, %v1509
    %v1512 = vlaneseq
    %vm1513 = vcmp.ge.s32.totalorder %v1512, 0
    %vm1514 = vcmp.lt.s32.totalorder %v1512, 256
    %vm1515 = vmand %vm1513, %vm1514
    %1516 = vst.msk [vmem:[#allocation2] sm:$0x3] %vm1515, %v1510
    // Predicated region
    $region30: #{tpu_custom_call.1} parent=1 // pred_check
      _
    $region31: #{tpu_custom_call.1} parent=1 // pred_check_branch
      %1518 = sbr.rel (0) target = $region33
    $region32: #{tpu_custom_call.1} parent=1 // pred_region
      %s1520 = ssub.s32 32, 32
      %1521 = vsyncadd [#allocation3], %s1520
      %s1523 = sshll.u32 [#allocation2], 4
      %s1524 = int_to_ptr.vmem [resolvable:$true] %s1523
      %1526 = dma.vmem_to_hbm [thread:$0]  %s1524, 32, %s7, [#allocation3]
    $region33: #{tpu_custom_call.1} parent=1 // pred_fallthru
      _
    // Predicated region
    $region34: #{tpu_custom_call.1} parent=1 // pred_check
      _
    $region35: #{tpu_custom_call.1} parent=1 // pred_check_branch
      %1528 = sbr.rel (0) target = $region37
    $region36: #{tpu_custom_call.1} parent=1 // pred_region
      %1529 = dma.done [#allocation3], 32
    $region37: #{tpu_custom_call.1} parent=1 // pred_fallthru
      _
    %1530 = vsyncpa [#allocation3], 1

</llo_original>
